<compile_context>
chip_gen: v5e
topology: v5e:2x2
jax: 0.10.0
libtpu: 0.0.40
codegen_flags: <defaults>
</compile_context>

<pallas_src>
import functools

import jax
import jax.numpy as jnp
import numpy as np
from jax.experimental import pallas as pl
from jax.experimental.pallas import tpu as pltpu

HIDDEN = 64
LANES = 128
ROW_ALIGN = 16          # sublane tile rows for bf16 (also valid for f32)


def _round_up(x, m):
    return (x + m - 1) // m * m


def _make_layout(in_dim):
    """Row offsets of each parameter inside the packed [rows, 128] slab."""
    lay = {}
    kp = _round_up(in_dim, ROW_ALIGN)       # padded K of layer 1
    r = 0
    lay["kp"] = kp
    lay["w1"] = r; r += kp                  # (kp, 128); rows >= in_dim are zero
    lay["b1"] = r; r += ROW_ALIGN           # row 0 of this block = b1
    lay["w2"] = r; r += LANES               # (128, 128); rows/cols >= 64 are zero
    lay["b2"] = r; r += ROW_ALIGN
    lay["w3"] = r; r += ROW_ALIGN           # w3 stored TRANSPOSED as one row
    lay["b3"] = r; r += ROW_ALIGN           # b3 broadcast across all 128 lanes
    lay["rows"] = r
    return lay


def pack_params(params, dtype=jnp.bfloat16):
    """Pack (w1,b1,w2,b2,w3,b3) into ONE lane-padded [rows, 128] slab.

    w1: (in_dim, 64), b1: (64,), w2: (64, 64), b2: (64,), w3: (64, 1), b3: (1,).
    Everything is zero-padded to 128 lanes (and w2 to 128 rows) so every
    in-kernel matmul is 128-lane dense; w3 is stored transposed as a single
    row and b3 is broadcast across all lanes for the compact layer-3 path.
    Done once at setup time, outside the forward hot path.
    """
    w1, b1, w2, b2, w3, b3 = params
    in_dim = w1.shape[0]
    lay = _make_layout(in_dim)
    slab = jnp.zeros((lay["rows"], LANES), jnp.float32)
    slab = slab.at[lay["w1"]:lay["w1"] + in_dim, :HIDDEN].set(w1)
    slab = slab.at[lay["b1"], :HIDDEN].set(b1.reshape(-1))
    slab = slab.at[lay["w2"]:lay["w2"] + HIDDEN, :HIDDEN].set(w2)
    slab = slab.at[lay["b2"], :HIDDEN].set(b2.reshape(-1))
    slab = slab.at[lay["w3"], :HIDDEN].set(w3.reshape(-1))        # transposed row
    slab = slab.at[lay["b3"], :].set(b3.reshape(()))              # broadcast b3
    return slab.astype(dtype)


def _make_kernel(lay, g_rows, compute_dtype):
    o_w1, o_b1 = lay["w1"], lay["b1"]
    o_w2, o_b2 = lay["w2"], lay["b2"]
    o_w3, o_b3 = lay["w3"], lay["b3"]
    kp = lay["kp"]
    f32 = jnp.float32

    def kernel(x_ref, p_ref, o_ref):
        # layer 1: single MXU matmul over the concatenated (state|action) tile.
        h1 = jnp.dot(x_ref[...], p_ref[o_w1:o_w1 + kp, :],
                     preferred_element_type=f32)
        h1 = jnp.maximum(h1 + p_ref[o_b1:o_b1 + 1, :].astype(f32), 0.0)
        # layer 2: 128x128 (zero-padded) MXU matmul, f32 accumulation.
        h2 = jnp.dot(h1.astype(compute_dtype), p_ref[o_w2:o_w2 + LANES, :],
                     preferred_element_type=f32)
        h2 = jnp.maximum(h2 + p_ref[o_b2:o_b2 + 1, :].astype(f32), 0.0)
        # layer 3 (64 -> 1) on VPU + XLU instead of the MXU:
        #   h3[row] = sum_k h2[row, k] * w3[k] + b3
        # the 128 results of each 128-row chunk are packed into the lanes of
        # one output row -> lane-dense, compact store (128x less HBM write).
        w3 = p_ref[o_w3:o_w3 + 1, :].astype(f32)     # (1,128), lanes >= 64 are 0
        b3 = p_ref[o_b3:o_b3 + 1, :].astype(f32)     # (1,128), all lanes = b3
        h2r = h2.reshape(g_rows, LANES, LANES)       # [chunk, row-in-chunk, k]
        h3 = jnp.sum(h2r * w3, axis=-1) + b3         # (g_rows, 128)
        o_ref[...] = h3.reshape(1, g_rows, LANES).astype(o_ref.dtype)

    return kernel


def _choose_tile(batch, block_b):
    """Batch tile: multiple of 128 rows; >=2 grid steps for big batches so the
    'parallel' axis shards across both v7x TensorCores; padding < one tile."""
    if batch <= 2 * LANES:
        return _round_up(max(batch, 1), LANES)
    n_steps = max(2, pl.cdiv(batch, block_b))
    return _round_up(pl.cdiv(batch, n_steps), LANES)


@functools.partial(jax.jit, static_argnames=("block_b",))
def mlp_critic_forward(state, action, param_slab, *, block_b=2048):
    """Equivalent of MLPNetworkCritic.forward(state, action) -> (B, 1) f32."""
    B, S = state.shape
    A = action.shape[1]
    lay = _make_layout(S + A)
    assert param_slab.shape == (lay["rows"], LANES), param_slab.shape
    assert block_b % LANES == 0 and block_b >= LANES

    cdt = param_slab.dtype
    kp = lay["kp"]
    tb = _choose_tile(B, block_b)
    bp = _round_up(B, tb)
    g_rows = tb // LANES
    n_steps = bp // tb

    # One contiguous LHS: concat(state, action); pad K to the 16-row tile and
    # the batch to whole tiles; cast MXU operands to the slab dtype (bf16).
    x = jnp.concatenate([state.astype(cdt), action.astype(cdt)], axis=1)
    x = jnp.pad(x, ((0, bp - B), (0, kp - (S + A))))

    kernel = _make_kernel(lay, g_rows, cdt)
    out = pl.pallas_call(
        kernel,
        out_shape=jax.ShapeDtypeStruct((n_steps, g_rows, LANES), jnp.float32),
        grid_spec=pltpu.PrefetchScalarGridSpec(
            num_scalar_prefetch=0,
            grid=(n_steps,),
            in_specs=[
                pl.BlockSpec((tb, kp), lambda i: (i, 0)),              # batch tile
                pl.BlockSpec((lay["rows"], LANES), lambda i: (0, 0)),  # weights (resident)
            ],
            out_specs=pl.BlockSpec((1, g_rows, LANES), lambda i: (i, 0, 0)),
        ),
        compiler_params=pltpu.CompilerParams(
            dimension_semantics=("parallel",),          # shard batch across TCs
            vmem_limit_bytes=32 * 1024 * 1024),
    )(x, param_slab)
    # Compact (n_steps, tb/128, 128) -> (B, 1): batch row b lives at flat index b.
    return out.reshape(-1)[:B][:, None]


def init_params(key, input_dim, hidden=HIDDEN):
    """Deterministic init mirroring nn.Linear shapes ((in, out) layout)."""
    k1, k2, k3, k4, k5, k6 = jax.random.split(key, 6)

    def uni(k, shape, fan_in):
        bound = 1.0 / np.sqrt(fan_in)
        return jax.random.uniform(k, shape, jnp.float32, -bound, bound)

    w1 = uni(k1, (input_dim, hidden), input_dim)
    b1 = uni(k2, (hidden,), input_dim)
    w2 = uni(k3, (hidden, hidden), hidden)
    b2 = uni(k4, (hidden,), hidden)
    w3 = uni(k5, (hidden, 1), hidden)
    b3 = uni(k6, (1,), hidden)
    return (w1, b1, w2, b2, w3, b3)


def reference_forward(state, action, params, compute_dtype=jnp.bfloat16):
    """Numpy reference with the same operand quantization as the kernel:
    bf16 MXU operands, f32 accumulation, f32 elementwise / layer-3 math."""
    def q(a):
        return np.asarray(jnp.asarray(a).astype(compute_dtype).astype(jnp.float32))

    w1, b1, w2, b2, w3, b3 = (q(p) for p in params)
    x = q(np.concatenate([np.asarray(state), np.asarray(action)], axis=1))
    h1 = np.maximum(x @ w1 + b1, 0.0)
    h2 = np.maximum(q(h1) @ w2 + b2, 0.0)
    return h2 @ w3 + b3


if __name__ == "__main__":
    # Small shapes: state_dims=[8, 4] -> 12, action_dims=[2, 2] -> 4
    state_dims = [8, 4]
    action_dims = [2, 2]
    S, A = sum(state_dims), sum(action_dims)
    batch = 8

    key = jax.random.PRNGKey(0)
    k_params, k_state, k_action = jax.random.split(key, 3)
    params = init_params(k_params, S + A)

    state = jax.random.normal(k_state, (batch, S), jnp.float32)
    action = jax.random.normal(k_action, (batch, A), jnp.float32)

    # Pack once outside the hot path; bf16 operands by default (f32 accumulate
    # in kernel). Pass dtype=jnp.float32 for a bit-exact-f32 critic if needed.
    slab = pack_params(params, dtype=jnp.bfloat16)

    out = mlp_critic_forward(state, action, slab)
    out = jax.block_until_ready(out)

    ref = reference_forward(state, action, params, compute_dtype=jnp.bfloat16)
    assert out.shape == (batch, 1), out.shape
    np.testing.assert_allclose(np.asarray(out), ref, rtol=1e-2, atol=1e-2)
    print("KERNEL_OK")
</pallas_src>

<mosaic_0001>
module attributes {stable_mosaic.version = 11 : i64} {
  func.func @kernel(%arg0: i32, %arg1: memref<128x16xbf16, #tpu.memory_space<vmem>>, %arg2: memref<208x128xbf16, #tpu.memory_space<vmem>>, %arg3: memref<1x1x128xf32, #tpu.memory_space<vmem>>) attributes {dimension_semantics = [#tpu.dimension_semantics<parallel>], iteration_bounds = array<i64: 1>, scalar_prefetch = 0 : i64, scratch_operands = 0 : i64, tpu.core_type = #tpu.core_type<tc>, window_params = [{transform_indices = @transform_0, window_bounds = array<i64: 128, 16>}, {pipeline_mode = #tpu.pipeline_mode<synchronous>, transform_indices = @transform_1, window_bounds = array<i64: 208, 128>}, {transform_indices = @transform_2, window_bounds = array<i64: 1, 1, 128>}]} {
    %c0 = arith.constant 0 : index
    %c0_0 = arith.constant 0 : index
    %0 = vector.load %arg1[%c0, %c0_0] : memref<128x16xbf16, #tpu.memory_space<vmem>>, vector<128x16xbf16>
    %c0_1 = arith.constant 0 : index
    %c0_2 = arith.constant 0 : index
    %1 = vector.load %arg2[%c0_1, %c0_2] : memref<208x128xbf16, #tpu.memory_space<vmem>>, vector<16x128xbf16>
    %cst = arith.constant dense<0.000000e+00> : vector<128x128xf32>
    %2 = tpu.matmul %0, %1, %cst {dimension_numbers = #tpu.dot_dimension_numbers<[1], [0], [0], [1], [0, 0, 1, 1], [], []>} : vector<128x16xbf16>, vector<16x128xbf16>, vector<128x128xf32> -> vector<128x128xf32>
    %c16 = arith.constant 16 : index
    %c0_3 = arith.constant 0 : index
    %3 = vector.load %arg2[%c16, %c0_3] : memref<208x128xbf16, #tpu.memory_space<vmem>>, vector<1x128xbf16>
    %4 = arith.extf %3 : vector<1x128xbf16> to vector<1x128xf32>
    %5 = vector.broadcast %4 : vector<1x128xf32> to vector<128x128xf32>
    %6 = arith.addf %2, %5 : vector<128x128xf32>
    %cst_4 = arith.constant 0.000000e+00 : f32
    %7 = vector.broadcast %cst_4 : f32 to vector<128x128xf32>
    %8 = arith.maximumf %6, %7 : vector<128x128xf32>
    %9 = arith.truncf %8 : vector<128x128xf32> to vector<128x128xbf16>
    %c32 = arith.constant 32 : index
    %c0_5 = arith.constant 0 : index
    %10 = vector.load %arg2[%c32, %c0_5] : memref<208x128xbf16, #tpu.memory_space<vmem>>, vector<128x128xbf16>
    %cst_6 = arith.constant dense<0.000000e+00> : vector<128x128xf32>
    %11 = tpu.matmul %9, %10, %cst_6 {dimension_numbers = #tpu.dot_dimension_numbers<[1], [0], [0], [1], [0, 0, 1, 1], [], []>} : vector<128x128xbf16>, vector<128x128xbf16>, vector<128x128xf32> -> vector<128x128xf32>
    %c160 = arith.constant 160 : index
    %c0_7 = arith.constant 0 : index
    %12 = vector.load %arg2[%c160, %c0_7] : memref<208x128xbf16, #tpu.memory_space<vmem>>, vector<1x128xbf16>
    %13 = arith.extf %12 : vector<1x128xbf16> to vector<1x128xf32>
    %14 = vector.broadcast %13 : vector<1x128xf32> to vector<128x128xf32>
    %15 = arith.addf %11, %14 : vector<128x128xf32>
    %cst_8 = arith.constant 0.000000e+00 : f32
    %16 = vector.broadcast %cst_8 : f32 to vector<128x128xf32>
    %17 = arith.maximumf %15, %16 : vector<128x128xf32>
    %c176 = arith.constant 176 : index
    %c0_9 = arith.constant 0 : index
    %18 = vector.load %arg2[%c176, %c0_9] : memref<208x128xbf16, #tpu.memory_space<vmem>>, vector<1x128xbf16>
    %19 = arith.extf %18 : vector<1x128xbf16> to vector<1x128xf32>
    %c192 = arith.constant 192 : index
    %c0_10 = arith.constant 0 : index
    %20 = vector.load %arg2[%c192, %c0_10] : memref<208x128xbf16, #tpu.memory_space<vmem>>, vector<1x128xbf16>
    %21 = arith.extf %20 : vector<1x128xbf16> to vector<1x128xf32>
    %22 = vector.shape_cast %17 : vector<128x128xf32> to vector<1x128x128xf32>
    %23 = vector.shape_cast %19 : vector<1x128xf32> to vector<1x1x128xf32>
    %24 = vector.broadcast %23 : vector<1x1x128xf32> to vector<1x128x128xf32>
    %25 = arith.mulf %22, %24 : vector<1x128x128xf32>
    %cst_11 = arith.constant dense<0.000000e+00> : vector<1x128xf32>
    %26 = vector.multi_reduction <add>, %25, %cst_11 [2] : vector<1x128x128xf32> to vector<1x128xf32>
    %27 = arith.addf %26, %21 : vector<1x128xf32>
    %28 = vector.shape_cast %27 : vector<1x128xf32> to vector<1x1x128xf32>
    %c0_12 = arith.constant 0 : index
    %c0_13 = arith.constant 0 : index
    %c0_14 = arith.constant 0 : index
    %29 = vector.load %arg3[%c0_12, %c0_13, %c0_14] : memref<1x1x128xf32, #tpu.memory_space<vmem>>, vector<1x1x128xf32>
    tpu.vector_store %arg3[%c0_12, %c0_13, %c0_14], %28 {strides = array<i32>} : memref<1x1x128xf32, #tpu.memory_space<vmem>>, vector<1x1x128xf32>,
    return
  }
  func.func @transform_0(%arg0: i32) -> (i32, i32) {
    %c0_i32 = arith.constant 0 : i32
    %c0_i32_0 = arith.constant 0 : i32
    return %arg0, %c0_i32 : i32, i32
  }
  func.func @transform_1(%arg0: i32) -> (i32, i32) {
    %c0_i32 = arith.constant 0 : i32
    %c0_i32_0 = arith.constant 0 : i32
    %c0_i32_1 = arith.constant 0 : i32
    return %c0_i32, %c0_i32_0 : i32, i32
  }
  func.func @transform_2(%arg0: i32) -> (i32, i32, i32) {
    %c0_i32 = arith.constant 0 : i32
    %c0_i32_0 = arith.constant 0 : i32
    %c0_i32_1 = arith.constant 0 : i32
    return %arg0, %c0_i32, %c0_i32_0 : i32, i32, i32
  }
}

</mosaic_0001>

<llo_original>
// kernel: mlp_critic_forward.1
$region0: #{mlp_critic_forward.1}
  #allocation0 [shape = 'u32[]', space=smem, size = 0x4, offset = 0x4, fixed_abs, tag = 'smem constant byte address 0x4 - core index']
  #allocation1 [shape = 'u32[72,128]{1,0:T(1,128)}', space=vmem, size = 0x9000, scoped, tag = 'internal scratch']
  %s0 = inlined_call_operand.vmem [shape: bf16[128,16], index: 0, kind: input, shape index: {}]
  %s1 = inlined_call_operand.hbm [shape: bf16[208,128], index: 1, kind: input, shape index: {}]
  %s2 = inlined_call_operand.vmem [shape: f32[1,1,128], index: 2, kind: output, shape index: {}]
  %s3 = sld [smem:[#allocation0]]
  $region22: #{mlp_critic_forward.1} parent=0
    _
  %s5 = ssub.s32 1, %s3
  %s6 = scalar_select 0, %s5, %s3
  $region1: #{mlp_critic_forward.1} parent=0
    #allocation2 [shape = 'u8[53248]{0}', space=vmem, size = 0xd000, scoped, tag = 'input window, operand 1, single buffered']
    #allocation3 [shape = 's32[1]{0}', space=sflag, size = 0x4, scoped, tag = 'scoped memory for mlp_critic_forward.1']
    %7 = vsyncpa [#allocation3], 0
    // Predicated region
    $region2: #{mlp_critic_forward.1} parent=1 // pred_check
      _
    $region3: #{mlp_critic_forward.1} parent=1 // pred_check_branch
      %9 = sbr.rel (0) target = $region5
    $region4: #{mlp_critic_forward.1} parent=1 // pred_region
      _
    $region5: #{mlp_critic_forward.1} parent=1 // pred_fallthru
      _
    // Predicated region
    $region6: #{mlp_critic_forward.1} parent=1 // pred_check
      _
    $region7: #{mlp_critic_forward.1} parent=1 // pred_check_branch
      %11 = sbr.rel (0) target = $region9
    $region8: #{mlp_critic_forward.1} parent=1 // pred_region
      %13 = vsyncadd [#allocation3], 0
      %s14 = sshll.u32 %s1, 4
      %s15 = int_to_ptr.hbm [resolvable:$true] %s14
      %s16 = sshll.u32 [#allocation2], 4
      %s17 = int_to_ptr.vmem [resolvable:$true] %s16
      %22 = dma.hbm_to_vmem [thread:$0]  %s15, 1664, %s17, [#allocation3], 64, 64, 4
    $region9: #{mlp_critic_forward.1} parent=1 // pred_fallthru
      _
    // Predicated region
    $region10: #{mlp_critic_forward.1} parent=1 // pred_check
      _
    $region11: #{mlp_critic_forward.1} parent=1 // pred_check_branch
      %24 = sbr.rel (0) target = $region13
    $region12: #{mlp_critic_forward.1} parent=1 // pred_region
      %26 = dma.done [#allocation3], 1664
    $region13: #{mlp_critic_forward.1} parent=1 // pred_fallthru
      _
    %v28 = vld [vmem:[%s0] sm:$0xf]
    %v29 = vld [vmem:[%s0 + $0x4] sm:$0xf]
    %v30 = vld [vmem:[%s0 + $0x8] sm:$0xf]
    %v31 = vld [vmem:[%s0 + $0xc] sm:$0xf]
    %v32 = vld [vmem:[%s0 + $0x10] sm:$0xf]
    %v33 = vld [vmem:[%s0 + $0x14] sm:$0xf]
    %v34 = vld [vmem:[%s0 + $0x18] sm:$0xf]
    %v35 = vld [vmem:[%s0 + $0x1c] sm:$0xf]
    %v36 = vld [vmem:[%s0 + $0x20] sm:$0xf]
    %v37 = vld [vmem:[%s0 + $0x24] sm:$0xf]
    %v38 = vld [vmem:[%s0 + $0x28] sm:$0xf]
    %v39 = vld [vmem:[%s0 + $0x2c] sm:$0xf]
    %v40 = vld [vmem:[%s0 + $0x30] sm:$0xf]
    %v41 = vld [vmem:[%s0 + $0x34] sm:$0xf]
    %v42 = vld [vmem:[%s0 + $0x38] sm:$0xf]
    %v43 = vld [vmem:[%s0 + $0x3c] sm:$0xf]
    %v44 = vld [vmem:[#allocation2] sm:$0xf]
    %v45 = vld [vmem:[#allocation2 + $0x4] sm:$0xf]
    %v46 = vld [vmem:[#allocation2 + $0x8] sm:$0x1]
    %v47 = vunpack.c.l.bf16 %v46
    %v48 = vperm.slane %v47, 0
    %v65 = vunpack.c.l.b16 %v28
    %v66 = vunpack.c.l.b16 %v29
    %v67 = vunpack.c.l.b16 %v30
    %v68 = vunpack.c.l.b16 %v31
    %v69 = vunpack.c.l.b16 %v32
    %v70 = vunpack.c.l.b16 %v33
    %v71 = vunpack.c.l.b16 %v34
    %v72 = vunpack.c.l.b16 %v35
    %v73 = vunpack.c.l.b16 %v36
    %v74 = vunpack.c.l.b16 %v37
    %v75 = vunpack.c.l.b16 %v38
    %v76 = vunpack.c.l.b16 %v39
    %v77 = vunpack.c.l.b16 %v40
    %v78 = vunpack.c.l.b16 %v41
    %v79 = vunpack.c.l.b16 %v42
    %v80 = vunpack.c.l.b16 %v43
    %v81 = vpack.c.b16 %v66, %v65
    %v82 = vpack.c.b16 %v68, %v67
    %v83 = vpack.c.b16 %v70, %v69
    %v84 = vpack.c.b16 %v72, %v71
    %v85 = vpack.c.b16 %v74, %v73
    %v86 = vpack.c.b16 %v76, %v75
    %v87 = vpack.c.b16 %v78, %v77
    %v88 = vpack.c.b16 %v80, %v79
    %v91 = vunpack.c.l.b16 %v44
    %v92 = vunpack.c.l.b16 %v45
    %v93 = vpack.c.b16 %v92, %v91
    %vm95 = vcmask 130048
    %v97 = vsel %vm95, %v81, 0
    %v100 = vsel %vm95, %v82, 0
    %v103 = vsel %vm95, %v83, 0
    %v106 = vsel %vm95, %v84, 0
    %v109 = vsel %vm95, %v85, 0
    %v112 = vsel %vm95, %v86, 0
    %v115 = vsel %vm95, %v87, 0
    %v118 = vsel %vm95, %v88, 0
    %120 = vmatpush.bf16.msra.mxu0 0
    %121 = vmatpush.bf16.msra.mxu0 0
    %122 = vmatpush.bf16.msra.mxu0 0
    %123 = vmatpush.bf16.msra.mxu0 0
    %124 = vmatpush.bf16.msra.mxu0 0
    %125 = vmatpush.bf16.msra.mxu0 0
    %126 = vmatpush.bf16.msra.mxu0 0
    %127 = vmatpush.bf16.msra.mxu0 %v93
    %128 = vmatmul.bf16.gmra.mxu0 %v97
    %v129 = vpop.f32.mrf.mxu0
    %v130 = vadd.f32 %v48, %v129
    %v131 = vpop.f32.mrf.mxu0
    %v132 = vadd.f32 %v48, %v131
    %133 = vmatmul.bf16.gmra.mxu0 %v100
    %v134 = vpop.f32.mrf.mxu0
    %v135 = vadd.f32 %v48, %v134
    %v136 = vpop.f32.mrf.mxu0
    %v137 = vadd.f32 %v48, %v136
    %138 = vmatmul.bf16.gmra.mxu0 %v103
    %v139 = vpop.f32.mrf.mxu0
    %v140 = vadd.f32 %v48, %v139
    %v141 = vpop.f32.mrf.mxu0
    %v142 = vadd.f32 %v48, %v141
    %143 = vmatmul.bf16.gmra.mxu0 %v106
    %v144 = vpop.f32.mrf.mxu0
    %v145 = vadd.f32 %v48, %v144
    %v146 = vpop.f32.mrf.mxu0
    %v147 = vadd.f32 %v48, %v146
    %148 = vmatmul.bf16.gmra.mxu0 %v109
    %v149 = vpop.f32.mrf.mxu0
    %v150 = vadd.f32 %v48, %v149
    %v151 = vpop.f32.mrf.mxu0
    %v152 = vadd.f32 %v48, %v151
    %153 = vmatmul.bf16.gmra.mxu0 %v112
    %v154 = vpop.f32.mrf.mxu0
    %v155 = vadd.f32 %v48, %v154
    %v156 = vpop.f32.mrf.mxu0
    %v157 = vadd.f32 %v48, %v156
    %158 = vmatmul.bf16.gmra.mxu0 %v115
    %v159 = vpop.f32.mrf.mxu0
    %v160 = vadd.f32 %v48, %v159
    %v161 = vpop.f32.mrf.mxu0
    %v162 = vadd.f32 %v48, %v161
    %163 = vmatmul.bf16.gmra.mxu0 %v118
    %v164 = vpop.f32.mrf.mxu0
    %v165 = vadd.f32 %v48, %v164
    %v166 = vpop.f32.mrf.mxu0
    %v167 = vadd.f32 %v48, %v166
    %168 = vdwg.mxu0
    %v169 = vmax.f32 %v130, 0.0
    %v170 = vmax.f32 %v132, 0.0
    %v171 = vmax.f32 %v135, 0.0
    %v172 = vmax.f32 %v137, 0.0
    %v173 = vmax.f32 %v140, 0.0
    %v174 = vmax.f32 %v142, 0.0
    %v175 = vmax.f32 %v145, 0.0
    %v176 = vmax.f32 %v147, 0.0
    %v177 = vmax.f32 %v150, 0.0
    %v178 = vmax.f32 %v152, 0.0
    %v179 = vmax.f32 %v155, 0.0
    %v180 = vmax.f32 %v157, 0.0
    %v181 = vmax.f32 %v160, 0.0
    %v182 = vmax.f32 %v162, 0.0
    %v183 = vmax.f32 %v165, 0.0
    %v184 = vmax.f32 %v167, 0.0
    %v185 = vpack.c.bf16 %v170, %v169
    %v186 = vpack.c.bf16 %v172, %v171
    %v187 = vpack.c.bf16 %v174, %v173
    %v188 = vpack.c.bf16 %v176, %v175
    %v189 = vpack.c.bf16 %v178, %v177
    %v190 = vpack.c.bf16 %v180, %v179
    %v191 = vpack.c.bf16 %v182, %v181
    %v192 = vpack.c.bf16 %v184, %v183
    %v193 = vld [vmem:[#allocation2 + $0x10] sm:$0xf]
    %v194 = vld [vmem:[#allocation2 + $0x14] sm:$0xf]
    %v195 = vld [vmem:[#allocation2 + $0x18] sm:$0xf]
    %v196 = vld [vmem:[#allocation2 + $0x1c] sm:$0xf]
    %v197 = vld [vmem:[#allocation2 + $0x20] sm:$0xf]
    %v198 = vld [vmem:[#allocation2 + $0x24] sm:$0xf]
    %v199 = vld [vmem:[#allocation2 + $0x28] sm:$0xf]
    %v200 = vld [vmem:[#allocation2 + $0x2c] sm:$0xf]
    %v201 = vld [vmem:[#allocation2 + $0x30] sm:$0xf]
    %v202 = vld [vmem:[#allocation2 + $0x34] sm:$0xf]
    %v203 = vld [vmem:[#allocation2 + $0x38] sm:$0xf]
    %v204 = vld [vmem:[#allocation2 + $0x3c] sm:$0xf]
    %v205 = vld [vmem:[#allocation2 + $0x40] sm:$0xf]
    %v206 = vld [vmem:[#allocation2 + $0x44] sm:$0xf]
    %v207 = vld [vmem:[#allocation2 + $0x48] sm:$0xf]
    %v208 = vld [vmem:[#allocation2 + $0x4c] sm:$0xf]
    %v209 = vld [vmem:[#allocation2 + $0x50] sm:$0x1]
    %v210 = vunpack.c.l.bf16 %v209
    %v211 = vperm.slane %v210, 0
    %v228 = vunpack.c.l.b16 %v193
    %v229 = vunpack.c.l.b16 %v194
    %v230 = vunpack.c.l.b16 %v195
    %v231 = vunpack.c.l.b16 %v196
    %v232 = vunpack.c.l.b16 %v197
    %v233 = vunpack.c.l.b16 %v198
    %v234 = vunpack.c.l.b16 %v199
    %v235 = vunpack.c.l.b16 %v200
    %v236 = vunpack.c.l.b16 %v201
    %v237 = vunpack.c.l.b16 %v202
    %v238 = vunpack.c.l.b16 %v203
    %v239 = vunpack.c.l.b16 %v204
    %v240 = vunpack.c.l.b16 %v205
    %v241 = vunpack.c.l.b16 %v206
    %v242 = vunpack.c.l.b16 %v207
    %v243 = vunpack.c.l.b16 %v208
    %v244 = vpack.c.b16 %v229, %v228
    %v245 = vpack.c.b16 %v231, %v230
    %v246 = vpack.c.b16 %v233, %v232
    %v247 = vpack.c.b16 %v235, %v234
    %v248 = vpack.c.b16 %v237, %v236
    %v249 = vpack.c.b16 %v239, %v238
    %v250 = vpack.c.b16 %v241, %v240
    %v251 = vpack.c.b16 %v243, %v242
    %260 = vmatpush.bf16.msra.mxu0 %v251
    %261 = vmatpush.bf16.msra.mxu0 %v250
    %262 = vmatpush.bf16.msra.mxu0 %v249
    %263 = vmatpush.bf16.msra.mxu0 %v248
    %264 = vmatpush.bf16.msra.mxu0 %v247
    %265 = vmatpush.bf16.msra.mxu0 %v246
    %266 = vmatpush.bf16.msra.mxu0 %v245
    %267 = vmatpush.bf16.msra.mxu0 %v244
    %268 = vmatmul.bf16.gmra.mxu0 %v185
    %v269 = vpop.f32.mrf.mxu0
    %v270 = vadd.f32 %v211, %v269
    %v271 = vpop.f32.mrf.mxu0
    %v272 = vadd.f32 %v211, %v271
    %273 = vmatmul.bf16.gmra.mxu0 %v186
    %v274 = vpop.f32.mrf.mxu0
    %v275 = vadd.f32 %v211, %v274
    %v276 = vpop.f32.mrf.mxu0
    %v277 = vadd.f32 %v211, %v276
    %278 = vmatmul.bf16.gmra.mxu0 %v187
    %v279 = vpop.f32.mrf.mxu0
    %v280 = vadd.f32 %v211, %v279
    %v281 = vpop.f32.mrf.mxu0
    %v282 = vadd.f32 %v211, %v281
    %283 = vmatmul.bf16.gmra.mxu0 %v188
    %v284 = vpop.f32.mrf.mxu0
    %v285 = vadd.f32 %v211, %v284
    %v286 = vpop.f32.mrf.mxu0
    %v287 = vadd.f32 %v211, %v286
    %288 = vmatmul.bf16.gmra.mxu0 %v189
    %v289 = vpop.f32.mrf.mxu0
    %v290 = vadd.f32 %v211, %v289
    %v291 = vpop.f32.mrf.mxu0
    %v292 = vadd.f32 %v211, %v291
    %293 = vmatmul.bf16.gmra.mxu0 %v190
    %v294 = vpop.f32.mrf.mxu0
    %v295 = vadd.f32 %v211, %v294
    %v296 = vpop.f32.mrf.mxu0
    %v297 = vadd.f32 %v211, %v296
    %298 = vmatmul.bf16.gmra.mxu0 %v191
    %v299 = vpop.f32.mrf.mxu0
    %v300 = vadd.f32 %v211, %v299
    %v301 = vpop.f32.mrf.mxu0
    %v302 = vadd.f32 %v211, %v301
    %303 = vmatmul.bf16.gmra.mxu0 %v192
    %v304 = vpop.f32.mrf.mxu0
    %v305 = vadd.f32 %v211, %v304
    %v306 = vpop.f32.mrf.mxu0
    %v307 = vadd.f32 %v211, %v306
    %308 = vdwg.mxu0
    %v309 = vmax.f32 %v270, 0.0
    %v310 = vmax.f32 %v272, 0.0
    %v311 = vmax.f32 %v275, 0.0
    %v312 = vmax.f32 %v277, 0.0
    %v313 = vmax.f32 %v280, 0.0
    %v314 = vmax.f32 %v282, 0.0
    %v315 = vmax.f32 %v285, 0.0
    %v316 = vmax.f32 %v287, 0.0
    %v317 = vmax.f32 %v290, 0.0
    %v318 = vmax.f32 %v292, 0.0
    %v319 = vmax.f32 %v295, 0.0
    %v320 = vmax.f32 %v297, 0.0
    %v321 = vmax.f32 %v300, 0.0
    %v322 = vmax.f32 %v302, 0.0
    %v323 = vmax.f32 %v305, 0.0
    %v324 = vmax.f32 %v307, 0.0
    %v325 = vld [vmem:[#allocation2 + $0x58] sm:$0x1]
    %v326 = vunpack.c.l.bf16 %v325
    %v327 = vld [vmem:[#allocation2 + $0x60] sm:$0x1]
    %v328 = vunpack.c.l.bf16 %v327
    %v329 = vperm.slane %v326, 0
    %v330 = vmul.f32 %v309, %v329
    %v331 = vmul.f32 %v310, %v329
    %v332 = vmul.f32 %v311, %v329
    %v333 = vmul.f32 %v312, %v329
    %v334 = vmul.f32 %v313, %v329
    %v335 = vmul.f32 %v314, %v329
    %v336 = vmul.f32 %v315, %v329
    %v337 = vmul.f32 %v316, %v329
    %v338 = vmul.f32 %v317, %v329
    %v339 = vmul.f32 %v318, %v329
    %v340 = vmul.f32 %v319, %v329
    %v341 = vmul.f32 %v320, %v329
    %v342 = vmul.f32 %v321, %v329
    %v343 = vmul.f32 %v322, %v329
    %v344 = vmul.f32 %v323, %v329
    %v345 = vmul.f32 %v324, %v329
    %346 = vadd.xlane.f32.xlu0 %v330
    %v347 = vpop.xlane.xlu0 %346
    %348 = vadd.xlane.f32.xlu0 %v331
    %v349 = vpop.xlane.xlu0 %348
    %350 = vadd.xlane.f32.xlu0 %v332
    %v351 = vpop.xlane.xlu0 %350
    %352 = vadd.xlane.f32.xlu0 %v333
    %v353 = vpop.xlane.xlu0 %352
    %354 = vadd.xlane.f32.xlu0 %v334
    %v355 = vpop.xlane.xlu0 %354
    %356 = vadd.xlane.f32.xlu0 %v335
    %v357 = vpop.xlane.xlu0 %356
    %358 = vadd.xlane.f32.xlu0 %v336
    %v359 = vpop.xlane.xlu0 %358
    %360 = vadd.xlane.f32.xlu0 %v337
    %v361 = vpop.xlane.xlu0 %360
    %362 = vadd.xlane.f32.xlu0 %v338
    %v363 = vpop.xlane.xlu0 %362
    %364 = vadd.xlane.f32.xlu0 %v339
    %v365 = vpop.xlane.xlu0 %364
    %366 = vadd.xlane.f32.xlu0 %v340
    %v367 = vpop.xlane.xlu0 %366
    %368 = vadd.xlane.f32.xlu0 %v341
    %v369 = vpop.xlane.xlu0 %368
    %370 = vadd.xlane.f32.xlu0 %v342
    %v371 = vpop.xlane.xlu0 %370
    %372 = vadd.xlane.f32.xlu0 %v343
    %v373 = vpop.xlane.xlu0 %372
    %374 = vadd.xlane.f32.xlu0 %v344
    %v375 = vpop.xlane.xlu0 %374
    %376 = vadd.xlane.f32.xlu0 %v345
    %v377 = vpop.xlane.xlu0 %376
    %v379 = vperm.slane %v328, 0
    %v380 = vlaneseq
    %v381 = vshrl.u32 %v380, 7
    %383 = vset.pattern.permute.xlu0 %v381
    %384 = vperm.xlu0 %383, %v379
    %v385 = vpop.permute.xlu0 %384
    %v386 = vlaneseq
    %v387 = vshrl.u32 %v386, 7
    %v388 = vadd.s32 %v387, 8
    %389 = vset.pattern.permute.xlu0 %v388
    %390 = vperm.xlu0 %389, %v379
    %v391 = vpop.permute.xlu0 %390
    %v392 = vlaneseq
    %v393 = vshrl.u32 %v392, 7
    %v394 = vadd.s32 %v393, 16
    %395 = vset.pattern.permute.xlu0 %v394
    %396 = vperm.xlu0 %395, %v379
    %v397 = vpop.permute.xlu0 %396
    %v398 = vlaneseq
    %v399 = vshrl.u32 %v398, 7
    %v400 = vadd.s32 %v399, 24
    %401 = vset.pattern.permute.xlu0 %v400
    %402 = vperm.xlu0 %401, %v379
    %v403 = vpop.permute.xlu0 %402
    %v404 = vlaneseq
    %v405 = vshrl.u32 %v404, 7
    %v406 = vadd.s32 %v405, 32
    %407 = vset.pattern.permute.xlu0 %v406
    %408 = vperm.xlu0 %407, %v379
    %v409 = vpop.permute.xlu0 %408
    %v410 = vlaneseq
    %v411 = vshrl.u32 %v410, 7
    %v412 = vadd.s32 %v411, 40
    %413 = vset.pattern.permute.xlu0 %v412
    %414 = vperm.xlu0 %413, %v379
    %v415 = vpop.permute.xlu0 %414
    %v416 = vlaneseq
    %v417 = vshrl.u32 %v416, 7
    %v418 = vadd.s32 %v417, 48
    %419 = vset.pattern.permute.xlu0 %v418
    %420 = vperm.xlu0 %419, %v379
    %v421 = vpop.permute.xlu0 %420
    %v422 = vlaneseq
    %v423 = vshrl.u32 %v422, 7
    %v424 = vadd.s32 %v423, 56
    %425 = vset.pattern.permute.xlu0 %v424
    %426 = vperm.xlu0 %425, %v379
    %v427 = vpop.permute.xlu0 %426
    %v428 = vlaneseq
    %v429 = vshrl.u32 %v428, 7
    %v430 = vadd.s32 %v429, 64
    %431 = vset.pattern.permute.xlu0 %v430
    %432 = vperm.xlu0 %431, %v379
    %v433 = vpop.permute.xlu0 %432
    %v434 = vlaneseq
    %v435 = vshrl.u32 %v434, 7
    %v436 = vadd.s32 %v435, 72
    %437 = vset.pattern.permute.xlu0 %v436
    %438 = vperm.xlu0 %437, %v379
    %v439 = vpop.permute.xlu0 %438
    %v440 = vlaneseq
    %v441 = vshrl.u32 %v440, 7
    %v442 = vadd.s32 %v441, 80
    %443 = vset.pattern.permute.xlu0 %v442
    %444 = vperm.xlu0 %443, %v379
    %v445 = vpop.permute.xlu0 %444
    %v446 = vlaneseq
    %v447 = vshrl.u32 %v446, 7
    %v448 = vadd.s32 %v447, 88
    %449 = vset.pattern.permute.xlu0 %v448
    %450 = vperm.xlu0 %449, %v379
    %v451 = vpop.permute.xlu0 %450
    %v452 = vlaneseq
    %v453 = vshrl.u32 %v452, 7
    %v454 = vadd.s32 %v453, 96
    %455 = vset.pattern.permute.xlu0 %v454
    %456 = vperm.xlu0 %455, %v379
    %v457 = vpop.permute.xlu0 %456
    %v458 = vlaneseq
    %v459 = vshrl.u32 %v458, 7
    %v460 = vadd.s32 %v459, 104
    %461 = vset.pattern.permute.xlu0 %v460
    %462 = vperm.xlu0 %461, %v379
    %v463 = vpop.permute.xlu0 %462
    %v464 = vlaneseq
    %v465 = vshrl.u32 %v464, 7
    %v466 = vadd.s32 %v465, 112
    %467 = vset.pattern.permute.xlu0 %v466
    %468 = vperm.xlu0 %467, %v379
    %v469 = vpop.permute.xlu0 %468
    %v470 = vlaneseq
    %v471 = vshrl.u32 %v470, 7
    %v472 = vadd.s32 %v471, 120
    %473 = vset.pattern.permute.xlu0 %v472
    %474 = vperm.xlu0 %473, %v379
    %v475 = vpop.permute.xlu0 %474
    %v492 = vadd.f32 %v347, %v385
    %v493 = vadd.f32 %v349, %v391
    %v494 = vadd.f32 %v351, %v397
    %v495 = vadd.f32 %v353, %v403
    %v496 = vadd.f32 %v355, %v409
    %v497 = vadd.f32 %v357, %v415
    %v498 = vadd.f32 %v359, %v421
    %v499 = vadd.f32 %v361, %v427
    %v500 = vadd.f32 %v363, %v433
    %v501 = vadd.f32 %v365, %v439
    %v502 = vadd.f32 %v367, %v445
    %v503 = vadd.f32 %v369, %v451
    %v504 = vadd.f32 %v371, %v457
    %v505 = vadd.f32 %v373, %v463
    %v506 = vadd.f32 %v375, %v469
    %v507 = vadd.f32 %v377, %v475
    %524 = vset.pattern.permute.xlu0 0
    %525 = vperm.xlu0 %524, %v492
    %v526 = vpop.permute.xlu0 %525
    %527 = vset.pattern.permute.xlu0 0
    %528 = vperm.xlu0 %527, %v493
    %v529 = vpop.permute.xlu0 %528
    %530 = vset.pattern.permute.xlu0 0
    %531 = vperm.xlu0 %530, %v494
    %v532 = vpop.permute.xlu0 %531
    %533 = vset.pattern.permute.xlu0 0
    %534 = vperm.xlu0 %533, %v495
    %v535 = vpop.permute.xlu0 %534
    %536 = vset.pattern.permute.xlu0 0
    %537 = vperm.xlu0 %536, %v496
    %v538 = vpop.permute.xlu0 %537
    %539 = vset.pattern.permute.xlu0 0
    %540 = vperm.xlu0 %539, %v497
    %v541 = vpop.permute.xlu0 %540
    %542 = vset.pattern.permute.xlu0 0
    %543 = vperm.xlu0 %542, %v498
    %v544 = vpop.permute.xlu0 %543
    %545 = vset.pattern.permute.xlu0 0
    %546 = vperm.xlu0 %545, %v499
    %v547 = vpop.permute.xlu0 %546
    %548 = vset.pattern.permute.xlu0 0
    %549 = vperm.xlu0 %548, %v500
    %v550 = vpop.permute.xlu0 %549
    %551 = vset.pattern.permute.xlu0 0
    %552 = vperm.xlu0 %551, %v501
    %v553 = vpop.permute.xlu0 %552
    %554 = vset.pattern.permute.xlu0 0
    %555 = vperm.xlu0 %554, %v502
    %v556 = vpop.permute.xlu0 %555
    %557 = vset.pattern.permute.xlu0 0
    %558 = vperm.xlu0 %557, %v503
    %v559 = vpop.permute.xlu0 %558
    %560 = vset.pattern.permute.xlu0 0
    %561 = vperm.xlu0 %560, %v504
    %v562 = vpop.permute.xlu0 %561
    %563 = vset.pattern.permute.xlu0 0
    %564 = vperm.xlu0 %563, %v505
    %v565 = vpop.permute.xlu0 %564
    %566 = vset.pattern.permute.xlu0 0
    %567 = vperm.xlu0 %566, %v506
    %v568 = vpop.permute.xlu0 %567
    %569 = vset.pattern.permute.xlu0 0
    %570 = vperm.xlu0 %569, %v507
    %v571 = vpop.permute.xlu0 %570
    %v572 = vlaneseq
    %v573 = vand.u32 %v572, 127
    %v574 = vperm.slane %v526, %v573
    %v575 = vadd.s32 %v573, 4294967288
    %v576 = vperm.slane %v529, %v575
    %vm577 = vcmask 130112
    %v578 = vsel %vm577, %v576, %v574
    %v579 = vadd.s32 %v573, 4294967280
    %v580 = vperm.slane %v532, %v579
    %vm581 = vcmask 195712
    %v582 = vsel %vm581, %v580, %v578
    %v583 = vadd.s32 %v573, 4294967272
    %v584 = vperm.slane %v535, %v583
    %vm585 = vcmask 261312
    %v586 = vsel %vm585, %v584, %v582
    %v587 = vadd.s32 %v573, 4294967264
    %v588 = vperm.slane %v538, %v587
    %vm589 = vcmask 326912
    %v590 = vsel %vm589, %v588, %v586
    %v591 = vadd.s32 %v573, 4294967256
    %v592 = vperm.slane %v541, %v591
    %vm593 = vcmask 392512
    %v594 = vsel %vm593, %v592, %v590
    %v595 = vadd.s32 %v573, 4294967248
    %v596 = vperm.slane %v544, %v595
    %vm597 = vcmask 458112
    %v598 = vsel %vm597, %v596, %v594
    %v599 = vadd.s32 %v573, 4294967240
    %v600 = vperm.slane %v547, %v599
    %vm601 = vcmask 523712
    %v602 = vsel %vm601, %v600, %v598
    %v603 = vadd.s32 %v573, 4294967232
    %v604 = vperm.slane %v550, %v603
    %vm605 = vcmask 589312
    %v606 = vsel %vm605, %v604, %v602
    %v607 = vadd.s32 %v573, 4294967224
    %v608 = vperm.slane %v553, %v607
    %vm609 = vcmask 654912
    %v610 = vsel %vm609, %v608, %v606
    %v611 = vadd.s32 %v573, 4294967216
    %v612 = vperm.slane %v556, %v611
    %vm613 = vcmask 720512
    %v614 = vsel %vm613, %v612, %v610
    %v615 = vadd.s32 %v573, 4294967208
    %v616 = vperm.slane %v559, %v615
    %vm617 = vcmask 786112
    %v618 = vsel %vm617, %v616, %v614
    %v619 = vadd.s32 %v573, 4294967200
    %v620 = vperm.slane %v562, %v619
    %vm621 = vcmask 851712
    %v622 = vsel %vm621, %v620, %v618
    %v623 = vadd.s32 %v573, 4294967192
    %v624 = vperm.slane %v565, %v623
    %vm625 = vcmask 917312
    %v626 = vsel %vm625, %v624, %v622
    %v627 = vadd.s32 %v573, 4294967184
    %v628 = vperm.slane %v568, %v627
    %vm629 = vcmask 982912
    %v630 = vsel %vm629, %v628, %v626
    %v631 = vadd.s32 %v573, 4294967176
    %v632 = vperm.slane %v571, %v631
    %vm633 = vcmask 1048512
    %v634 = vsel %vm633, %v632, %v630
    %636 = vst [vmem:[%s2] sm:$0x1] %v634
    // Predicated region
    $region14: #{mlp_critic_forward.1} parent=1 // pred_check
      _
    $region15: #{mlp_critic_forward.1} parent=1 // pred_check_branch
      %638 = sbr.rel (0) target = $region17
    $region16: #{mlp_critic_forward.1} parent=1 // pred_region
      _
    $region17: #{mlp_critic_forward.1} parent=1 // pred_fallthru
      _
    // Predicated region
    $region18: #{mlp_critic_forward.1} parent=1 // pred_check
      _
    $region19: #{mlp_critic_forward.1} parent=1 // pred_check_branch
      %640 = sbr.rel (0) target = $region21
    $region20: #{mlp_critic_forward.1} parent=1 // pred_region
      _
    $region21: #{mlp_critic_forward.1} parent=1 // pred_fallthru
      _
    %641 = vsyncpa [#allocation3], 1

</llo_original>
